<compile_context>
chip_gen: v5e
topology: v5e:2x2
jax: 0.10.0
libtpu: 0.0.40
codegen_flags: <defaults>
</compile_context>

<pallas_src>
import functools

import jax
import jax.numpy as jnp
from jax.experimental import pallas as pl
from jax.experimental.pallas import tpu as pltpu

_LANE = 128


def _ae_push_kernel(s_rowT_ref, s_col_ref, mask_ref, out_ref, *,
                    thr, n_valid, need_valid):
    """One (TI, TJ) tile of the pairwise push term.

    s_rowT_ref : (TI, L) f32   sigmoid(avg), row (i) slice, pre-transposed
    s_col_ref  : (L, TJ) f32   sigmoid(avg), column (j) slice
    mask_ref   : (L, TI, TJ)   int8/bool mask tile (streamed straight from HBM)
    out_ref    : (1, 2, 8, TJ) f32 lane-dense partial sums per i-tile
                 [.., 0, :, :] = sum over kept cells of mask*(thr - dist)
                 [.., 1, :, :] = sum over kept cells of mask (element count)
    """
    gj = pl.program_id(1)

    @pl.when(gj == 0)
    def _():
        out_ref[...] = jnp.zeros_like(out_ref)

    s_rowT = s_rowT_ref[...]                  # (TI, L)
    s_col = s_col_ref[...]                    # (L, TJ)
    TI, L = s_rowT.shape
    TJ = s_col.shape[1]

    # Running reduction over L: only 3 f32 planes live (never (L,TI,TJ)).
    dmax = jnp.zeros((TI, TJ), jnp.float32)
    S = jnp.zeros((TI, TJ), jnp.float32)      # sum_l mask_l * dist_l
    C = jnp.zeros((TI, TJ), jnp.float32)      # sum_l mask_l
    for l in range(L):                        # L is tiny & static -> unrolled
        d = jnp.abs(s_col[l:l + 1, :] - s_rowT[:, l:l + 1])   # (TI, TJ)
        m = mask_ref[l].astype(jnp.float32)                    # one int8 slice
        dmax = jnp.maximum(dmax, d)
        S = S + m * d
        C = C + m

    # keep = (no channel exceeds thr at this (i,j))  [& in-bounds if ragged]
    keep = dmax <= thr
    if need_valid:
        gi = pl.program_id(0)
        row_ok = (gi * TI + jax.lax.broadcasted_iota(jnp.int32, (TI, 1), 0)) < n_valid
        col_ok = (gj * TJ + jax.lax.broadcasted_iota(jnp.int32, (1, TJ), 1)) < n_valid
        keep = jnp.logical_and(keep, jnp.logical_and(row_ok, col_ok))

    # sum_l mask_l*(thr - dist_l) == thr*C - S  (relu is redundant under keep).
    dist_part = jnp.where(keep, thr * C - S, 0.0)
    cnt_part = jnp.where(keep, C, 0.0)

    # Reduce to (8, TJ) with pure vreg adds (reshape is layout-preserving),
    # accumulate into the lane-dense output block that is resident over j.
    out_ref[0, 0] += dist_part.reshape(TI // 8, 8, TJ).sum(axis=0)
    out_ref[0, 1] += cnt_part.reshape(TI // 8, 8, TJ).sum(axis=0)


def _clamp_tile(n, target):
    """Largest multiple of 128 that is >=128, <= target and <= n (n >= 128)."""
    t = min(int(target), int(n))
    t -= t % _LANE
    return max(t, _LANE)


def ae_loss_v2(lof_tag_img, lof_tag_avg_img, lof_tag_avg_gather_img, mask,
               nmultinminus1mulnumlof, centerness_img=None, *,
               pull_factor, push_factor, margin_push, num_lof,
               tile_i=None, tile_j=None):
    L, N = lof_tag_img.shape
    assert L == num_lof
    thr = 0.5 + float(margin_push)

    # ---------------- pull (BCE) term: O(L*N), plain JAX ----------------
    x = lof_tag_img.astype(jnp.float32)
    gl = lof_tag_avg_gather_img.astype(jnp.float32)
    t = jnp.round(jax.nn.sigmoid(gl))
    # BCEWithLogitsLoss(reduction='none'), numerically stable form.
    tag = jnp.maximum(x, 0.0) - x * t + jnp.log1p(jnp.exp(-jnp.abs(x)))

    # ---------------- push term: tiled Pallas kernel --------------------
    s = jax.nn.sigmoid(lof_tag_avg_img.astype(jnp.float32))    # (L, N)

    # Mask is streamed as-is (int8 preferred; bool also passes straight
    # through) -- no O(L*N^2) astype/pad copies.  Only tiny N (<128) gets
    # padded up to one 128x128 tile.
    s_k, mask_k, Nk = s, mask, N
    if N < _LANE:
        pad = _LANE - N
        s_k = jnp.pad(s, ((0, 0), (0, pad)))
        mask_k = jnp.pad(mask, ((0, 0), (0, pad), (0, pad)))
        Nk = _LANE

    # Generation-aware VMEM budget / tile sizing.
    try:
        vmem_cap = int(pltpu.get_tpu_info().vmem_capacity_bytes)
    except Exception:
        vmem_cap = 64 * 2**20                       # conservative fallback
    vmem_limit = max(16 * 2**20, min(int(0.45 * vmem_cap), 64 * 2**20))

    if tile_j is None:
        tile_j = 1024
    TJ = _clamp_tile(Nk, tile_j)
    if tile_i is None:
        budget = vmem_limit // 2                    # headroom for temporaries
        per_elem = 2 * L + 36                       # 2x int8 mask buf + f32 planes
        cand = (budget // (per_elem * TJ)) // _LANE * _LANE
        tile_i = min(512, max(_LANE, int(cand)))
    TI = _clamp_tile(Nk, tile_i)

    grid_i = pl.cdiv(Nk, TI)
    grid_j = pl.cdiv(Nk, TJ)
    # Ragged tail -> partial blocks hold unspecified data; mask it in-kernel.
    need_valid = (Nk % TI != 0) or (Nk % TJ != 0)

    # TODO(synk): on v5e, deepen the mask stream with
    # pipeline_mode=pl.Buffered(3) on the mask BlockSpec (HBM-bound there).
    parts = pl.pallas_call(
        functools.partial(_ae_push_kernel, thr=thr, n_valid=int(N),
                          need_valid=need_valid),
        out_shape=jax.ShapeDtypeStruct((grid_i, 2, 8, TJ), jnp.float32),
        grid=(grid_i, grid_j),
        in_specs=[
            pl.BlockSpec((TI, L), lambda i, j: (i, 0)),          # sigmoid rows (transposed)
            pl.BlockSpec((L, TJ), lambda i, j: (0, j)),          # sigmoid cols
            pl.BlockSpec((L, TI, TJ), lambda i, j: (0, i, j)),   # mask tile (int8/bool)
        ],
        out_specs=pl.BlockSpec((1, 2, 8, TJ), lambda i, j: (i, 0, 0, 0)),
        compiler_params=pltpu.CompilerParams(
            dimension_semantics=("parallel", "arbitrary"),
            vmem_limit_bytes=int(vmem_limit)),
    )(s_k.T, s_k, mask_k)

    # Cheap final cross-lane reductions + divisions in plain JAX.
    dist_sum = jnp.sum(parts[:, 0])
    # NOTE: counts are exact integers per lane; the f32 tree-sum here only
    # loses exactness for astronomically large kept-pair counts.
    cnt = jnp.sum(parts[:, 1])
    nfac = nmultinminus1mulnumlof.astype(jnp.float32)

    if centerness_img is not None:
        cent = centerness_img.astype(jnp.float32)
        pull = jnp.sum(tag * cent) / jnp.sum(cent)
        push = jnp.where(cnt > 0.0, dist_sum / nfac, jnp.zeros_like(dist_sum))
    else:
        pull = jnp.mean(tag)
        # mean over masked-selected elements (NaN if mask empty, matching torch)
        push = dist_sum / cnt
    return pull_factor * pull, push_factor * push


def _reference(x, avg, gl, mask, nfac, cent, pull_factor, push_factor,
               margin_push, num_lof):
    mask = mask.astype(bool)
    t = jnp.round(jax.nn.sigmoid(gl))
    tag = jnp.maximum(x, 0.0) - x * t + jnp.log1p(jnp.exp(-jnp.abs(x)))
    s = jax.nn.sigmoid(avg)
    dist = jnp.abs(s[:, None, :] - s[:, :, None])
    thr = 0.5 + margin_push
    dist_mask = (jnp.sum(dist > thr, axis=0, keepdims=True) == 0)
    m = dist_mask & mask
    d = jnp.maximum(thr - dist, 0.0)
    if cent is not None:
        pull = jnp.sum(tag * cent) / jnp.sum(cent)
        push = jnp.where(jnp.any(m),
                         jnp.sum(jnp.where(m, d, 0.0)) / nfac.astype(jnp.float32),
                         0.0)
    else:
        pull = tag.mean()
        push = jnp.sum(jnp.where(m, d, 0.0)) / jnp.sum(m)
    return pull_factor * pull, push_factor * push


if __name__ == "__main__":
    pull_factor, push_factor, margin_push = 0.1, 0.1, 0.2

    def run_case(key, num_lof, N, use_cent, **kw):
        k1, k2, k3, k4, k5 = jax.random.split(key, 5)
        x = jax.random.normal(k1, (num_lof, N), jnp.float32)
        avg = jax.random.normal(k2, (num_lof, N), jnp.float32)
        gl = jax.random.normal(k3, (num_lof, N), jnp.float32)
        # Callers should pass the mask as int8 (or bool) -- it is streamed
        # straight to the kernel without any wrapper-side copy.
        mask = jax.random.bernoulli(k4, 0.5, (num_lof, N, N)).astype(jnp.int8)
        cent = (jax.random.uniform(k5, (num_lof, N), jnp.float32)
                if use_cent else None)
        nfac = jnp.asarray(N * (N - 1) * num_lof, jnp.int32)

        pull, push = ae_loss_v2(
            x, avg, gl, mask, nfac, cent,
            pull_factor=pull_factor, push_factor=push_factor,
            margin_push=margin_push, num_lof=num_lof, **kw)
        jax.block_until_ready((pull, push))

        rpull, rpush = _reference(x, avg, gl, mask, nfac, cent, pull_factor,
                                  push_factor, margin_push, num_lof)
        assert jnp.allclose(pull, rpull, atol=1e-5, rtol=2e-4), (pull, rpull)
        assert jnp.allclose(push, rpush, atol=1e-5, rtol=2e-4), (push, rpush)

    key = jax.random.PRNGKey(0)
    k1, k2, k3, k4 = jax.random.split(key, 4)
    # tiny N (<128): padded-to-one-tile path, centerness branch
    run_case(k1, num_lof=4, N=16, use_cent=True)
    # centerness_img=None branch (pull = tag.mean(), push = masked mean)
    run_case(k2, num_lof=4, N=16, use_cent=False)
    # ragged N: 2x2 grid of (L,128,128) tiles with in-kernel validity masking
    run_case(k3, num_lof=3, N=200, use_cent=True, tile_i=128, tile_j=128)
    # lane-aligned N with auto tile sizing (no edge masking)
    run_case(k4, num_lof=2, N=256, use_cent=True)

    print("KERNEL_OK")
</pallas_src>

<mosaic_0001>
module attributes {stable_mosaic.version = 11 : i64} {
  func.func @_ae_push_kernel(%arg0: i32, %arg1: i32, %arg2: memref<128x4xf32, #tpu.memory_space<vmem>>, %arg3: memref<4x128xf32, #tpu.memory_space<vmem>>, %arg4: memref<4x128x128xi8, #tpu.memory_space<vmem>>, %arg5: memref<1x2x8x128xf32, #tpu.memory_space<vmem>>) attributes {dimension_semantics = [#tpu.dimension_semantics<parallel>, #tpu.dimension_semantics<arbitrary>], iteration_bounds = array<i64: 1, 1>, scalar_prefetch = 0 : i64, scratch_operands = 0 : i64, tpu.core_type = #tpu.core_type<tc>, window_params = [{transform_indices = @transform_0, window_bounds = array<i64: 128, 4>}, {transform_indices = @transform_1, window_bounds = array<i64: 4, 128>}, {transform_indices = @transform_2, window_bounds = array<i64: 4, 128, 128>}, {transform_indices = @transform_3, window_bounds = array<i64: 1, 2, 8, 128>}]} {
    %c0_i32 = arith.constant 0 : i32
    %0 = arith.cmpi eq, %arg1, %c0_i32 : i32
    %1 = arith.extui %0 : i1 to i32
    %c0_i32_0 = arith.constant 0 : i32
    %2 = arith.cmpi ne, %1, %c0_i32_0 : i32
    scf.if %2 {
      %cst_37 = arith.constant 0.000000e+00 : f32
      %85 = vector.broadcast %cst_37 : f32 to vector<1x2x8x128xf32>
      %c0_38 = arith.constant 0 : index
      %c0_39 = arith.constant 0 : index
      %c0_40 = arith.constant 0 : index
      %c0_41 = arith.constant 0 : index
      %86 = vector.load %arg5[%c0_38, %c0_39, %c0_40, %c0_41] : memref<1x2x8x128xf32, #tpu.memory_space<vmem>>, vector<1x2x8x128xf32>
      tpu.vector_store %arg5[%c0_38, %c0_39, %c0_40, %c0_41], %85 {strides = array<i32>} : memref<1x2x8x128xf32, #tpu.memory_space<vmem>>, vector<1x2x8x128xf32>,
    } else {
    }
    %c0 = arith.constant 0 : index
    %c0_1 = arith.constant 0 : index
    %3 = vector.load %arg2[%c0, %c0_1] : memref<128x4xf32, #tpu.memory_space<vmem>>, vector<128x4xf32>
    %c0_2 = arith.constant 0 : index
    %c0_3 = arith.constant 0 : index
    %4 = vector.load %arg3[%c0_2, %c0_3] : memref<4x128xf32, #tpu.memory_space<vmem>>, vector<4x128xf32>
    %cst = arith.constant 0.000000e+00 : f32
    %5 = vector.broadcast %cst : f32 to vector<128x128xf32>
    %cst_4 = arith.constant 0.000000e+00 : f32
    %6 = vector.broadcast %cst_4 : f32 to vector<128x128xf32>
    %cst_5 = arith.constant 0.000000e+00 : f32
    %7 = vector.broadcast %cst_5 : f32 to vector<128x128xf32>
    %8 = vector.extract_strided_slice %4 {offsets = [0, 0], sizes = [1, 128], strides = [1, 1]} : vector<4x128xf32> to vector<1x128xf32>
    %9 = vector.extract_strided_slice %3 {offsets = [0, 0], sizes = [128, 1], strides = [1, 1]} : vector<128x4xf32> to vector<128x1xf32>
    %10 = vector.broadcast %8 : vector<1x128xf32> to vector<128x128xf32>
    %11 = vector.broadcast %9 : vector<128x1xf32> to vector<128x128xf32>
    %12 = arith.subf %10, %11 : vector<128x128xf32>
    %13 = math.absf %12 : vector<128x128xf32>
    %c0_6 = arith.constant 0 : index
    %c0_7 = arith.constant 0 : index
    %c0_8 = arith.constant 0 : index
    %14 = vector.load %arg4[%c0_6, %c0_7, %c0_8] : memref<4x128x128xi8, #tpu.memory_space<vmem>>, vector<1x128x128xi8>
    %15 = vector.shape_cast %14 : vector<1x128x128xi8> to vector<128x128xi8>
    %16 = arith.sitofp %15 : vector<128x128xi8> to vector<128x128xf32>
    %17 = arith.maximumf %5, %13 : vector<128x128xf32>
    %18 = arith.mulf %16, %13 : vector<128x128xf32>
    %19 = arith.addf %6, %18 : vector<128x128xf32>
    %20 = arith.addf %7, %16 : vector<128x128xf32>
    %21 = vector.extract_strided_slice %4 {offsets = [1, 0], sizes = [1, 128], strides = [1, 1]} : vector<4x128xf32> to vector<1x128xf32>
    %22 = vector.extract_strided_slice %3 {offsets = [0, 1], sizes = [128, 1], strides = [1, 1]} : vector<128x4xf32> to vector<128x1xf32>
    %23 = vector.broadcast %21 : vector<1x128xf32> to vector<128x128xf32>
    %24 = vector.broadcast %22 : vector<128x1xf32> to vector<128x128xf32>
    %25 = arith.subf %23, %24 : vector<128x128xf32>
    %26 = math.absf %25 : vector<128x128xf32>
    %c1 = arith.constant 1 : index
    %c0_9 = arith.constant 0 : index
    %c0_10 = arith.constant 0 : index
    %27 = vector.load %arg4[%c1, %c0_9, %c0_10] : memref<4x128x128xi8, #tpu.memory_space<vmem>>, vector<1x128x128xi8>
    %28 = vector.shape_cast %27 : vector<1x128x128xi8> to vector<128x128xi8>
    %29 = arith.sitofp %28 : vector<128x128xi8> to vector<128x128xf32>
    %30 = arith.maximumf %17, %26 : vector<128x128xf32>
    %31 = arith.mulf %29, %26 : vector<128x128xf32>
    %32 = arith.addf %19, %31 : vector<128x128xf32>
    %33 = arith.addf %20, %29 : vector<128x128xf32>
    %34 = vector.extract_strided_slice %4 {offsets = [2, 0], sizes = [1, 128], strides = [1, 1]} : vector<4x128xf32> to vector<1x128xf32>
    %35 = vector.extract_strided_slice %3 {offsets = [0, 2], sizes = [128, 1], strides = [1, 1]} : vector<128x4xf32> to vector<128x1xf32>
    %36 = vector.broadcast %34 : vector<1x128xf32> to vector<128x128xf32>
    %37 = vector.broadcast %35 : vector<128x1xf32> to vector<128x128xf32>
    %38 = arith.subf %36, %37 : vector<128x128xf32>
    %39 = math.absf %38 : vector<128x128xf32>
    %c2 = arith.constant 2 : index
    %c0_11 = arith.constant 0 : index
    %c0_12 = arith.constant 0 : index
    %40 = vector.load %arg4[%c2, %c0_11, %c0_12] : memref<4x128x128xi8, #tpu.memory_space<vmem>>, vector<1x128x128xi8>
    %41 = vector.shape_cast %40 : vector<1x128x128xi8> to vector<128x128xi8>
    %42 = arith.sitofp %41 : vector<128x128xi8> to vector<128x128xf32>
    %43 = arith.maximumf %30, %39 : vector<128x128xf32>
    %44 = arith.mulf %42, %39 : vector<128x128xf32>
    %45 = arith.addf %32, %44 : vector<128x128xf32>
    %46 = arith.addf %33, %42 : vector<128x128xf32>
    %47 = vector.extract_strided_slice %4 {offsets = [3, 0], sizes = [1, 128], strides = [1, 1]} : vector<4x128xf32> to vector<1x128xf32>
    %48 = vector.extract_strided_slice %3 {offsets = [0, 3], sizes = [128, 1], strides = [1, 1]} : vector<128x4xf32> to vector<128x1xf32>
    %49 = vector.broadcast %47 : vector<1x128xf32> to vector<128x128xf32>
    %50 = vector.broadcast %48 : vector<128x1xf32> to vector<128x128xf32>
    %51 = arith.subf %49, %50 : vector<128x128xf32>
    %52 = math.absf %51 : vector<128x128xf32>
    %c3 = arith.constant 3 : index
    %c0_13 = arith.constant 0 : index
    %c0_14 = arith.constant 0 : index
    %53 = vector.load %arg4[%c3, %c0_13, %c0_14] : memref<4x128x128xi8, #tpu.memory_space<vmem>>, vector<1x128x128xi8>
    %54 = vector.shape_cast %53 : vector<1x128x128xi8> to vector<128x128xi8>
    %55 = arith.sitofp %54 : vector<128x128xi8> to vector<128x128xf32>
    %56 = arith.maximumf %43, %52 : vector<128x128xf32>
    %57 = arith.mulf %55, %52 : vector<128x128xf32>
    %58 = arith.addf %45, %57 : vector<128x128xf32>
    %59 = arith.addf %46, %55 : vector<128x128xf32>
    %cst_15 = arith.constant 0.699999988 : f32
    %60 = vector.broadcast %cst_15 : f32 to vector<128x128xf32>
    %61 = arith.cmpf ole, %56, %60 : vector<128x128xf32>
    %cst_16 = arith.constant 0.699999988 : f32
    %62 = vector.broadcast %cst_16 : f32 to vector<128x128xf32>
    %63 = arith.mulf %62, %59 : vector<128x128xf32>
    %64 = arith.subf %63, %58 : vector<128x128xf32>
    %cst_17 = arith.constant 0.000000e+00 : f32
    %65 = vector.broadcast %cst_17 : f32 to vector<128x128xf32>
    %66 = arith.select %61, %64, %65 : vector<128x128xi1>, vector<128x128xf32>
    %cst_18 = arith.constant 0.000000e+00 : f32
    %67 = vector.broadcast %cst_18 : f32 to vector<128x128xf32>
    %68 = arith.select %61, %59, %67 : vector<128x128xi1>, vector<128x128xf32>
    %c0_19 = arith.constant 0 : index
    %c0_20 = arith.constant 0 : index
    %c0_21 = arith.constant 0 : index
    %c0_22 = arith.constant 0 : index
    %69 = vector.load %arg5[%c0_19, %c0_20, %c0_21, %c0_22] : memref<1x2x8x128xf32, #tpu.memory_space<vmem>>, vector<1x1x8x128xf32>
    %70 = vector.shape_cast %69 : vector<1x1x8x128xf32> to vector<8x128xf32>
    %71 = vector.shape_cast %66 : vector<128x128xf32> to vector<16x8x128xf32>
    %cst_23 = arith.constant dense<0.000000e+00> : vector<8x128xf32>
    %72 = vector.multi_reduction <add>, %71, %cst_23 [0] : vector<16x8x128xf32> to vector<8x128xf32>
    %73 = arith.addf %70, %72 : vector<8x128xf32>
    %c0_24 = arith.constant 0 : index
    %c0_25 = arith.constant 0 : index
    %c0_26 = arith.constant 0 : index
    %c0_27 = arith.constant 0 : index
    %74 = vector.load %arg5[%c0_24, %c0_25, %c0_26, %c0_27] : memref<1x2x8x128xf32, #tpu.memory_space<vmem>>, vector<1x1x8x128xf32>
    %75 = vector.shape_cast %74 : vector<1x1x8x128xf32> to vector<8x128xf32>
    %76 = vector.shape_cast %73 : vector<8x128xf32> to vector<1x1x8x128xf32>
    tpu.vector_store %arg5[%c0_24, %c0_25, %c0_26, %c0_27], %76 {strides = array<i32>} : memref<1x2x8x128xf32, #tpu.memory_space<vmem>>, vector<1x1x8x128xf32>,
    %c0_28 = arith.constant 0 : index
    %c1_29 = arith.constant 1 : index
    %c0_30 = arith.constant 0 : index
    %c0_31 = arith.constant 0 : index
    %77 = vector.load %arg5[%c0_28, %c1_29, %c0_30, %c0_31] : memref<1x2x8x128xf32, #tpu.memory_space<vmem>>, vector<1x1x8x128xf32>
    %78 = vector.shape_cast %77 : vector<1x1x8x128xf32> to vector<8x128xf32>
    %79 = vector.shape_cast %68 : vector<128x128xf32> to vector<16x8x128xf32>
    %cst_32 = arith.constant dense<0.000000e+00> : vector<8x128xf32>
    %80 = vector.multi_reduction <add>, %79, %cst_32 [0] : vector<16x8x128xf32> to vector<8x128xf32>
    %81 = arith.addf %78, %80 : vector<8x128xf32>
    %c0_33 = arith.constant 0 : index
    %c1_34 = arith.constant 1 : index
    %c0_35 = arith.constant 0 : index
    %c0_36 = arith.constant 0 : index
    %82 = vector.load %arg5[%c0_33, %c1_34, %c0_35, %c0_36] : memref<1x2x8x128xf32, #tpu.memory_space<vmem>>, vector<1x1x8x128xf32>
    %83 = vector.shape_cast %82 : vector<1x1x8x128xf32> to vector<8x128xf32>
    %84 = vector.shape_cast %81 : vector<8x128xf32> to vector<1x1x8x128xf32>
    tpu.vector_store %arg5[%c0_33, %c1_34, %c0_35, %c0_36], %84 {strides = array<i32>} : memref<1x2x8x128xf32, #tpu.memory_space<vmem>>, vector<1x1x8x128xf32>,
    return
  }
  func.func @transform_0(%arg0: i32, %arg1: i32) -> (i32, i32) {
    %c0_i32 = arith.constant 0 : i32
    %c0_i32_0 = arith.constant 0 : i32
    return %arg0, %c0_i32 : i32, i32
  }
  func.func @transform_1(%arg0: i32, %arg1: i32) -> (i32, i32) {
    %c0_i32 = arith.constant 0 : i32
    %c0_i32_0 = arith.constant 0 : i32
    return %c0_i32, %arg1 : i32, i32
  }
  func.func @transform_2(%arg0: i32, %arg1: i32) -> (i32, i32, i32) {
    %c0_i32 = arith.constant 0 : i32
    %c0_i32_0 = arith.constant 0 : i32
    return %c0_i32, %arg0, %arg1 : i32, i32, i32
  }
  func.func @transform_3(%arg0: i32, %arg1: i32) -> (i32, i32, i32, i32) {
    %c0_i32 = arith.constant 0 : i32
    %c0_i32_0 = arith.constant 0 : i32
    %c0_i32_1 = arith.constant 0 : i32
    %c0_i32_2 = arith.constant 0 : i32
    return %arg0, %c0_i32, %c0_i32_0, %c0_i32_1 : i32, i32, i32, i32
  }
}

</mosaic_0001>

<llo_original>
// kernel: tpu_custom_call.1
$region0: #{tpu_custom_call.1}
  #allocation0 [shape = 'u32[]', space=smem, size = 0x4, offset = 0x4, fixed_abs, tag = 'smem constant byte address 0x4 - core index']
  #allocation1 [shape = 'u32[72,128]{1,0:T(1,128)}', space=vmem, size = 0x9000, scoped, tag = 'internal scratch']
  %s0 = inlined_call_operand.vmem [shape: f32[128,4], index: 0, kind: input, shape index: {}]
  %s1 = inlined_call_operand.vmem [shape: f32[4,128], index: 1, kind: input, shape index: {}]
  %s2 = inlined_call_operand.vmem [shape: s8[4,128,128], index: 2, kind: input, shape index: {}]
  %s3 = inlined_call_operand.hbm [shape: f32[1,2,8,128], index: 3, kind: output, shape index: {}]
  %s4 = sld [smem:[#allocation0]]
  $region26: #{tpu_custom_call.1} parent=0
    _
  %s6 = ssub.s32 1, %s4
  %s7 = scalar_select 0, %s6, %s4
  $region1: #{tpu_custom_call.1} parent=0
    #allocation2 [shape = 'u8[8192]{0}', space=vmem, size = 0x2000, scoped, tag = 'output window, operand 0, single buffered']
    #allocation3 [shape = 's32[1]{0}', space=sflag, size = 0x4, scoped, tag = 'scoped memory for tpu_custom_call.1']
    %8 = vsyncpa [#allocation3], 0
    // Predicated region
    $region2: #{tpu_custom_call.1} parent=1 // pred_check
      _
    $region3: #{tpu_custom_call.1} parent=1 // pred_check_branch
      %10 = sbr.rel (0) target = $region5
    $region4: #{tpu_custom_call.1} parent=1 // pred_region
      _
    $region5: #{tpu_custom_call.1} parent=1 // pred_fallthru
      _
    // Predicated region
    $region6: #{tpu_custom_call.1} parent=1 // pred_check
      _
    $region7: #{tpu_custom_call.1} parent=1 // pred_check_branch
      %12 = sbr.rel (0) target = $region9
    $region8: #{tpu_custom_call.1} parent=1 // pred_region
      _
    $region9: #{tpu_custom_call.1} parent=1 // pred_fallthru
      _
    // Predicated region
    $region10: #{tpu_custom_call.1} parent=1 // pred_check
      _
    $region11: #{tpu_custom_call.1} parent=1 // pred_check_branch
      %14 = sbr.rel (0) target = $region13
    $region12: #{tpu_custom_call.1} parent=1 // pred_region
      _
    $region13: #{tpu_custom_call.1} parent=1 // pred_fallthru
      _
    %p15 = scmp.eq.s32.totalorder 0, 0
    // Predicated region
    $region14: #{tpu_custom_call.1} parent=1 // pred_check
      %p16 = pneg %p15
    $region15: #{tpu_custom_call.1} parent=1 // pred_check_branch
      %18 = sbr.rel (%p16) target = $region17
    $region16: #{tpu_custom_call.1} parent=1 // pred_region
      %19 = vst [vmem:[#allocation2] sm:$0xff] 0.0
      %20 = vst [vmem:[#allocation2 + $0x8] sm:$0xff] 0.0
    $region17: #{tpu_custom_call.1} parent=1 // pred_fallthru
      _
    %v21 = vld [vmem:[%s0] sm:$0xff]
    %v22 = vld [vmem:[%s0 + $0x8] sm:$0xff]
    %v23 = vld [vmem:[%s0 + $0x10] sm:$0xff]
    %v24 = vld [vmem:[%s0 + $0x18] sm:$0xff]
    %v25 = vld [vmem:[%s0 + $0x20] sm:$0xff]
    %v26 = vld [vmem:[%s0 + $0x28] sm:$0xff]
    %v27 = vld [vmem:[%s0 + $0x30] sm:$0xff]
    %v28 = vld [vmem:[%s0 + $0x38] sm:$0xff]
    %v29 = vld [vmem:[%s0 + $0x40] sm:$0xff]
    %v30 = vld [vmem:[%s0 + $0x48] sm:$0xff]
    %v31 = vld [vmem:[%s0 + $0x50] sm:$0xff]
    %v32 = vld [vmem:[%s0 + $0x58] sm:$0xff]
    %v33 = vld [vmem:[%s0 + $0x60] sm:$0xff]
    %v34 = vld [vmem:[%s0 + $0x68] sm:$0xff]
    %v35 = vld [vmem:[%s0 + $0x70] sm:$0xff]
    %v36 = vld [vmem:[%s0 + $0x78] sm:$0xff]
    %v37 = vld [vmem:[%s1] sm:$0xf]
    %v38 = vperm.slane %v37, 0
    %40 = vset.pattern.permute.xlu0 0
    %41 = vperm.xlu0 %40, %v21
    %v42 = vpop.permute.xlu0 %41
    %45 = vset.pattern.permute.xlu0 0
    %46 = vperm.xlu0 %45, %v22
    %v47 = vpop.permute.xlu0 %46
    %50 = vset.pattern.permute.xlu0 0
    %51 = vperm.xlu0 %50, %v23
    %v52 = vpop.permute.xlu0 %51
    %55 = vset.pattern.permute.xlu0 0
    %56 = vperm.xlu0 %55, %v24
    %v57 = vpop.permute.xlu0 %56
    %60 = vset.pattern.permute.xlu0 0
    %61 = vperm.xlu0 %60, %v25
    %v62 = vpop.permute.xlu0 %61
    %65 = vset.pattern.permute.xlu0 0
    %66 = vperm.xlu0 %65, %v26
    %v67 = vpop.permute.xlu0 %66
    %70 = vset.pattern.permute.xlu0 0
    %71 = vperm.xlu0 %70, %v27
    %v72 = vpop.permute.xlu0 %71
    %75 = vset.pattern.permute.xlu0 0
    %76 = vperm.xlu0 %75, %v28
    %v77 = vpop.permute.xlu0 %76
    %80 = vset.pattern.permute.xlu0 0
    %81 = vperm.xlu0 %80, %v29
    %v82 = vpop.permute.xlu0 %81
    %85 = vset.pattern.permute.xlu0 0
    %86 = vperm.xlu0 %85, %v30
    %v87 = vpop.permute.xlu0 %86
    %90 = vset.pattern.permute.xlu0 0
    %91 = vperm.xlu0 %90, %v31
    %v92 = vpop.permute.xlu0 %91
    %95 = vset.pattern.permute.xlu0 0
    %96 = vperm.xlu0 %95, %v32
    %v97 = vpop.permute.xlu0 %96
    %100 = vset.pattern.permute.xlu0 0
    %101 = vperm.xlu0 %100, %v33
    %v102 = vpop.permute.xlu0 %101
    %105 = vset.pattern.permute.xlu0 0
    %106 = vperm.xlu0 %105, %v34
    %v107 = vpop.permute.xlu0 %106
    %110 = vset.pattern.permute.xlu0 0
    %111 = vperm.xlu0 %110, %v35
    %v112 = vpop.permute.xlu0 %111
    %115 = vset.pattern.permute.xlu0 0
    %116 = vperm.xlu0 %115, %v36
    %v117 = vpop.permute.xlu0 %116
    %v119 = vsub.f32 %v38, %v42
    %v120 = vsub.f32 %v38, %v47
    %v121 = vsub.f32 %v38, %v52
    %v122 = vsub.f32 %v38, %v57
    %v123 = vsub.f32 %v38, %v62
    %v124 = vsub.f32 %v38, %v67
    %v125 = vsub.f32 %v38, %v72
    %v126 = vsub.f32 %v38, %v77
    %v127 = vsub.f32 %v38, %v82
    %v128 = vsub.f32 %v38, %v87
    %v129 = vsub.f32 %v38, %v92
    %v130 = vsub.f32 %v38, %v97
    %v131 = vsub.f32 %v38, %v102
    %v132 = vsub.f32 %v38, %v107
    %v133 = vsub.f32 %v38, %v112
    %v134 = vsub.f32 %v38, %v117
    %v135 = vand.u32 2147483647, %v119
    %v136 = vand.u32 2147483647, %v120
    %v137 = vand.u32 2147483647, %v121
    %v138 = vand.u32 2147483647, %v122
    %v139 = vand.u32 2147483647, %v123
    %v140 = vand.u32 2147483647, %v124
    %v141 = vand.u32 2147483647, %v125
    %v142 = vand.u32 2147483647, %v126
    %v143 = vand.u32 2147483647, %v127
    %v144 = vand.u32 2147483647, %v128
    %v145 = vand.u32 2147483647, %v129
    %v146 = vand.u32 2147483647, %v130
    %v147 = vand.u32 2147483647, %v131
    %v148 = vand.u32 2147483647, %v132
    %v149 = vand.u32 2147483647, %v133
    %v150 = vand.u32 2147483647, %v134
    %v151 = vld [vmem:[%s2] sm:$0xff]
    %v152 = vld [vmem:[%s2 + $0x8] sm:$0xff]
    %v153 = vld [vmem:[%s2 + $0x10] sm:$0xff]
    %v154 = vld [vmem:[%s2 + $0x18] sm:$0xff]
    %v155 = vunpack.c.0.s8 %v151
    %v156 = vunpack.c.1.s8 %v151
    %v157 = vunpack.c.2.s8 %v151
    %v158 = vunpack.c.3.s8 %v151
    %v159 = vunpack.c.0.s8 %v152
    %v160 = vunpack.c.1.s8 %v152
    %v161 = vunpack.c.2.s8 %v152
    %v162 = vunpack.c.3.s8 %v152
    %v163 = vunpack.c.0.s8 %v153
    %v164 = vunpack.c.1.s8 %v153
    %v165 = vunpack.c.2.s8 %v153
    %v166 = vunpack.c.3.s8 %v153
    %v167 = vunpack.c.0.s8 %v154
    %v168 = vunpack.c.1.s8 %v154
    %v169 = vunpack.c.2.s8 %v154
    %v170 = vunpack.c.3.s8 %v154
    %v171 = vcvt.s32.f32 %v155
    %v172 = vcvt.s32.f32 %v156
    %v173 = vcvt.s32.f32 %v157
    %v174 = vcvt.s32.f32 %v158
    %v175 = vcvt.s32.f32 %v159
    %v176 = vcvt.s32.f32 %v160
    %v177 = vcvt.s32.f32 %v161
    %v178 = vcvt.s32.f32 %v162
    %v179 = vcvt.s32.f32 %v163
    %v180 = vcvt.s32.f32 %v164
    %v181 = vcvt.s32.f32 %v165
    %v182 = vcvt.s32.f32 %v166
    %v183 = vcvt.s32.f32 %v167
    %v184 = vcvt.s32.f32 %v168
    %v185 = vcvt.s32.f32 %v169
    %v186 = vcvt.s32.f32 %v170
    %v187 = vmax.f32 %v135, 0.0
    %v188 = vmax.f32 %v136, 0.0
    %v189 = vmax.f32 %v137, 0.0
    %v190 = vmax.f32 %v138, 0.0
    %v191 = vmax.f32 %v139, 0.0
    %v192 = vmax.f32 %v140, 0.0
    %v193 = vmax.f32 %v141, 0.0
    %v194 = vmax.f32 %v142, 0.0
    %v195 = vmax.f32 %v143, 0.0
    %v196 = vmax.f32 %v144, 0.0
    %v197 = vmax.f32 %v145, 0.0
    %v198 = vmax.f32 %v146, 0.0
    %v199 = vmax.f32 %v147, 0.0
    %v200 = vmax.f32 %v148, 0.0
    %v201 = vmax.f32 %v149, 0.0
    %v202 = vmax.f32 %v150, 0.0
    %v203 = vmul.f32 %v171, %v135
    %v204 = vmul.f32 %v172, %v136
    %v205 = vmul.f32 %v173, %v137
    %v206 = vmul.f32 %v174, %v138
    %v207 = vmul.f32 %v175, %v139
    %v208 = vmul.f32 %v176, %v140
    %v209 = vmul.f32 %v177, %v141
    %v210 = vmul.f32 %v178, %v142
    %v211 = vmul.f32 %v179, %v143
    %v212 = vmul.f32 %v180, %v144
    %v213 = vmul.f32 %v181, %v145
    %v214 = vmul.f32 %v182, %v146
    %v215 = vmul.f32 %v183, %v147
    %v216 = vmul.f32 %v184, %v148
    %v217 = vmul.f32 %v185, %v149
    %v218 = vmul.f32 %v186, %v150
    %v219 = vadd.f32 %v203, 0.0
    %v220 = vadd.f32 %v204, 0.0
    %v221 = vadd.f32 %v205, 0.0
    %v222 = vadd.f32 %v206, 0.0
    %v223 = vadd.f32 %v207, 0.0
    %v224 = vadd.f32 %v208, 0.0
    %v225 = vadd.f32 %v209, 0.0
    %v226 = vadd.f32 %v210, 0.0
    %v227 = vadd.f32 %v211, 0.0
    %v228 = vadd.f32 %v212, 0.0
    %v229 = vadd.f32 %v213, 0.0
    %v230 = vadd.f32 %v214, 0.0
    %v231 = vadd.f32 %v215, 0.0
    %v232 = vadd.f32 %v216, 0.0
    %v233 = vadd.f32 %v217, 0.0
    %v234 = vadd.f32 %v218, 0.0
    %v235 = vadd.f32 %v171, 0.0
    %v236 = vadd.f32 %v172, 0.0
    %v237 = vadd.f32 %v173, 0.0
    %v238 = vadd.f32 %v174, 0.0
    %v239 = vadd.f32 %v175, 0.0
    %v240 = vadd.f32 %v176, 0.0
    %v241 = vadd.f32 %v177, 0.0
    %v242 = vadd.f32 %v178, 0.0
    %v243 = vadd.f32 %v179, 0.0
    %v244 = vadd.f32 %v180, 0.0
    %v245 = vadd.f32 %v181, 0.0
    %v246 = vadd.f32 %v182, 0.0
    %v247 = vadd.f32 %v183, 0.0
    %v248 = vadd.f32 %v184, 0.0
    %v249 = vadd.f32 %v185, 0.0
    %v250 = vadd.f32 %v186, 0.0
    %v251 = vperm.slane %v37, 1
    %252 = vset.pattern.permute.xlu0 1
    %253 = vperm.xlu0 %252, %v21
    %v254 = vpop.permute.xlu0 %253
    %256 = vset.pattern.permute.xlu0 1
    %257 = vperm.xlu0 %256, %v22
    %v258 = vpop.permute.xlu0 %257
    %260 = vset.pattern.permute.xlu0 1
    %261 = vperm.xlu0 %260, %v23
    %v262 = vpop.permute.xlu0 %261
    %264 = vset.pattern.permute.xlu0 1
    %265 = vperm.xlu0 %264, %v24
    %v266 = vpop.permute.xlu0 %265
    %268 = vset.pattern.permute.xlu0 1
    %269 = vperm.xlu0 %268, %v25
    %v270 = vpop.permute.xlu0 %269
    %272 = vset.pattern.permute.xlu0 1
    %273 = vperm.xlu0 %272, %v26
    %v274 = vpop.permute.xlu0 %273
    %276 = vset.pattern.permute.xlu0 1
    %277 = vperm.xlu0 %276, %v27
    %v278 = vpop.permute.xlu0 %277
    %280 = vset.pattern.permute.xlu0 1
    %281 = vperm.xlu0 %280, %v28
    %v282 = vpop.permute.xlu0 %281
    %284 = vset.pattern.permute.xlu0 1
    %285 = vperm.xlu0 %284, %v29
    %v286 = vpop.permute.xlu0 %285
    %288 = vset.pattern.permute.xlu0 1
    %289 = vperm.xlu0 %288, %v30
    %v290 = vpop.permute.xlu0 %289
    %292 = vset.pattern.permute.xlu0 1
    %293 = vperm.xlu0 %292, %v31
    %v294 = vpop.permute.xlu0 %293
    %296 = vset.pattern.permute.xlu0 1
    %297 = vperm.xlu0 %296, %v32
    %v298 = vpop.permute.xlu0 %297
    %300 = vset.pattern.permute.xlu0 1
    %301 = vperm.xlu0 %300, %v33
    %v302 = vpop.permute.xlu0 %301
    %304 = vset.pattern.permute.xlu0 1
    %305 = vperm.xlu0 %304, %v34
    %v306 = vpop.permute.xlu0 %305
    %308 = vset.pattern.permute.xlu0 1
    %309 = vperm.xlu0 %308, %v35
    %v310 = vpop.permute.xlu0 %309
    %312 = vset.pattern.permute.xlu0 1
    %313 = vperm.xlu0 %312, %v36
    %v314 = vpop.permute.xlu0 %313
    %v316 = vsub.f32 %v251, %v254
    %v317 = vsub.f32 %v251, %v258
    %v318 = vsub.f32 %v251, %v262
    %v319 = vsub.f32 %v251, %v266
    %v320 = vsub.f32 %v251, %v270
    %v321 = vsub.f32 %v251, %v274
    %v322 = vsub.f32 %v251, %v278
    %v323 = vsub.f32 %v251, %v282
    %v324 = vsub.f32 %v251, %v286
    %v325 = vsub.f32 %v251, %v290
    %v326 = vsub.f32 %v251, %v294
    %v327 = vsub.f32 %v251, %v298
    %v328 = vsub.f32 %v251, %v302
    %v329 = vsub.f32 %v251, %v306
    %v330 = vsub.f32 %v251, %v310
    %v331 = vsub.f32 %v251, %v314
    %v332 = vand.u32 2147483647, %v316
    %v333 = vand.u32 2147483647, %v317
    %v334 = vand.u32 2147483647, %v318
    %v335 = vand.u32 2147483647, %v319
    %v336 = vand.u32 2147483647, %v320
    %v337 = vand.u32 2147483647, %v321
    %v338 = vand.u32 2147483647, %v322
    %v339 = vand.u32 2147483647, %v323
    %v340 = vand.u32 2147483647, %v324
    %v341 = vand.u32 2147483647, %v325
    %v342 = vand.u32 2147483647, %v326
    %v343 = vand.u32 2147483647, %v327
    %v344 = vand.u32 2147483647, %v328
    %v345 = vand.u32 2147483647, %v329
    %v346 = vand.u32 2147483647, %v330
    %v347 = vand.u32 2147483647, %v331
    %s348 = scalar_lea.vmem %s2, 32
    %v349 = vld [vmem:[%s348] sm:$0xff]
    %v350 = vld [vmem:[%s348 + $0x8] sm:$0xff]
    %v351 = vld [vmem:[%s348 + $0x10] sm:$0xff]
    %v352 = vld [vmem:[%s348 + $0x18] sm:$0xff]
    %v353 = vunpack.c.0.s8 %v349
    %v354 = vunpack.c.1.s8 %v349
    %v355 = vunpack.c.2.s8 %v349
    %v356 = vunpack.c.3.s8 %v349
    %v357 = vunpack.c.0.s8 %v350
    %v358 = vunpack.c.1.s8 %v350
    %v359 = vunpack.c.2.s8 %v350
    %v360 = vunpack.c.3.s8 %v350
    %v361 = vunpack.c.0.s8 %v351
    %v362 = vunpack.c.1.s8 %v351
    %v363 = vunpack.c.2.s8 %v351
    %v364 = vunpack.c.3.s8 %v351
    %v365 = vunpack.c.0.s8 %v352
    %v366 = vunpack.c.1.s8 %v352
    %v367 = vunpack.c.2.s8 %v352
    %v368 = vunpack.c.3.s8 %v352
    %v369 = vcvt.s32.f32 %v353
    %v370 = vcvt.s32.f32 %v354
    %v371 = vcvt.s32.f32 %v355
    %v372 = vcvt.s32.f32 %v356
    %v373 = vcvt.s32.f32 %v357
    %v374 = vcvt.s32.f32 %v358
    %v375 = vcvt.s32.f32 %v359
    %v376 = vcvt.s32.f32 %v360
    %v377 = vcvt.s32.f32 %v361
    %v378 = vcvt.s32.f32 %v362
    %v379 = vcvt.s32.f32 %v363
    %v380 = vcvt.s32.f32 %v364
    %v381 = vcvt.s32.f32 %v365
    %v382 = vcvt.s32.f32 %v366
    %v383 = vcvt.s32.f32 %v367
    %v384 = vcvt.s32.f32 %v368
    %v385 = vmax.f32 %v187, %v332
    %v386 = vmax.f32 %v188, %v333
    %v387 = vmax.f32 %v189, %v334
    %v388 = vmax.f32 %v190, %v335
    %v389 = vmax.f32 %v191, %v336
    %v390 = vmax.f32 %v192, %v337
    %v391 = vmax.f32 %v193, %v338
    %v392 = vmax.f32 %v194, %v339
    %v393 = vmax.f32 %v195, %v340
    %v394 = vmax.f32 %v196, %v341
    %v395 = vmax.f32 %v197, %v342
    %v396 = vmax.f32 %v198, %v343
    %v397 = vmax.f32 %v199, %v344
    %v398 = vmax.f32 %v200, %v345
    %v399 = vmax.f32 %v201, %v346
    %v400 = vmax.f32 %v202, %v347
    %v401 = vmul.f32 %v369, %v332
    %v402 = vmul.f32 %v370, %v333
    %v403 = vmul.f32 %v371, %v334
    %v404 = vmul.f32 %v372, %v335
    %v405 = vmul.f32 %v373, %v336
    %v406 = vmul.f32 %v374, %v337
    %v407 = vmul.f32 %v375, %v338
    %v408 = vmul.f32 %v376, %v339
    %v409 = vmul.f32 %v377, %v340
    %v410 = vmul.f32 %v378, %v341
    %v411 = vmul.f32 %v379, %v342
    %v412 = vmul.f32 %v380, %v343
    %v413 = vmul.f32 %v381, %v344
    %v414 = vmul.f32 %v382, %v345
    %v415 = vmul.f32 %v383, %v346
    %v416 = vmul.f32 %v384, %v347
    %v417 = vadd.f32 %v219, %v401
    %v418 = vadd.f32 %v220, %v402
    %v419 = vadd.f32 %v221, %v403
    %v420 = vadd.f32 %v222, %v404
    %v421 = vadd.f32 %v223, %v405
    %v422 = vadd.f32 %v224, %v406
    %v423 = vadd.f32 %v225, %v407
    %v424 = vadd.f32 %v226, %v408
    %v425 = vadd.f32 %v227, %v409
    %v426 = vadd.f32 %v228, %v410
    %v427 = vadd.f32 %v229, %v411
    %v428 = vadd.f32 %v230, %v412
    %v429 = vadd.f32 %v231, %v413
    %v430 = vadd.f32 %v232, %v414
    %v431 = vadd.f32 %v233, %v415
    %v432 = vadd.f32 %v234, %v416
    %v433 = vadd.f32 %v235, %v369
    %v434 = vadd.f32 %v236, %v370
    %v435 = vadd.f32 %v237, %v371
    %v436 = vadd.f32 %v238, %v372
    %v437 = vadd.f32 %v239, %v373
    %v438 = vadd.f32 %v240, %v374
    %v439 = vadd.f32 %v241, %v375
    %v440 = vadd.f32 %v242, %v376
    %v441 = vadd.f32 %v243, %v377
    %v442 = vadd.f32 %v244, %v378
    %v443 = vadd.f32 %v245, %v379
    %v444 = vadd.f32 %v246, %v380
    %v445 = vadd.f32 %v247, %v381
    %v446 = vadd.f32 %v248, %v382
    %v447 = vadd.f32 %v249, %v383
    %v448 = vadd.f32 %v250, %v384
    %v449 = vperm.slane %v37, 2
    %450 = vset.pattern.permute.xlu0 2
    %451 = vperm.xlu0 %450, %v21
    %v452 = vpop.permute.xlu0 %451
    %454 = vset.pattern.permute.xlu0 2
    %455 = vperm.xlu0 %454, %v22
    %v456 = vpop.permute.xlu0 %455
    %458 = vset.pattern.permute.xlu0 2
    %459 = vperm.xlu0 %458, %v23
    %v460 = vpop.permute.xlu0 %459
    %462 = vset.pattern.permute.xlu0 2
    %463 = vperm.xlu0 %462, %v24
    %v464 = vpop.permute.xlu0 %463
    %466 = vset.pattern.permute.xlu0 2
    %467 = vperm.xlu0 %466, %v25
    %v468 = vpop.permute.xlu0 %467
    %470 = vset.pattern.permute.xlu0 2
    %471 = vperm.xlu0 %470, %v26
    %v472 = vpop.permute.xlu0 %471
    %474 = vset.pattern.permute.xlu0 2
    %475 = vperm.xlu0 %474, %v27
    %v476 = vpop.permute.xlu0 %475
    %478 = vset.pattern.permute.xlu0 2
    %479 = vperm.xlu0 %478, %v28
    %v480 = vpop.permute.xlu0 %479
    %482 = vset.pattern.permute.xlu0 2
    %483 = vperm.xlu0 %482, %v29
    %v484 = vpop.permute.xlu0 %483
    %486 = vset.pattern.permute.xlu0 2
    %487 = vperm.xlu0 %486, %v30
    %v488 = vpop.permute.xlu0 %487
    %490 = vset.pattern.permute.xlu0 2
    %491 = vperm.xlu0 %490, %v31
    %v492 = vpop.permute.xlu0 %491
    %494 = vset.pattern.permute.xlu0 2
    %495 = vperm.xlu0 %494, %v32
    %v496 = vpop.permute.xlu0 %495
    %498 = vset.pattern.permute.xlu0 2
    %499 = vperm.xlu0 %498, %v33
    %v500 = vpop.permute.xlu0 %499
    %502 = vset.pattern.permute.xlu0 2
    %503 = vperm.xlu0 %502, %v34
    %v504 = vpop.permute.xlu0 %503
    %506 = vset.pattern.permute.xlu0 2
    %507 = vperm.xlu0 %506, %v35
    %v508 = vpop.permute.xlu0 %507
    %510 = vset.pattern.permute.xlu0 2
    %511 = vperm.xlu0 %510, %v36
    %v512 = vpop.permute.xlu0 %511
    %v514 = vsub.f32 %v449, %v452
    %v515 = vsub.f32 %v449, %v456
    %v516 = vsub.f32 %v449, %v460
    %v517 = vsub.f32 %v449, %v464
    %v518 = vsub.f32 %v449, %v468
    %v519 = vsub.f32 %v449, %v472
    %v520 = vsub.f32 %v449, %v476
    %v521 = vsub.f32 %v449, %v480
    %v522 = vsub.f32 %v449, %v484
    %v523 = vsub.f32 %v449, %v488
    %v524 = vsub.f32 %v449, %v492
    %v525 = vsub.f32 %v449, %v496
    %v526 = vsub.f32 %v449, %v500
    %v527 = vsub.f32 %v449, %v504
    %v528 = vsub.f32 %v449, %v508
    %v529 = vsub.f32 %v449, %v512
    %v530 = vand.u32 2147483647, %v514
    %v531 = vand.u32 2147483647, %v515
    %v532 = vand.u32 2147483647, %v516
    %v533 = vand.u32 2147483647, %v517
    %v534 = vand.u32 2147483647, %v518
    %v535 = vand.u32 2147483647, %v519
    %v536 = vand.u32 2147483647, %v520
    %v537 = vand.u32 2147483647, %v521
    %v538 = vand.u32 2147483647, %v522
    %v539 = vand.u32 2147483647, %v523
    %v540 = vand.u32 2147483647, %v524
    %v541 = vand.u32 2147483647, %v525
    %v542 = vand.u32 2147483647, %v526
    %v543 = vand.u32 2147483647, %v527
    %v544 = vand.u32 2147483647, %v528
    %v545 = vand.u32 2147483647, %v529
    %s546 = scalar_lea.vmem %s2, 64
    %v547 = vld [vmem:[%s546] sm:$0xff]
    %v548 = vld [vmem:[%s546 + $0x8] sm:$0xff]
    %v549 = vld [vmem:[%s546 + $0x10] sm:$0xff]
    %v550 = vld [vmem:[%s546 + $0x18] sm:$0xff]
    %v551 = vunpack.c.0.s8 %v547
    %v552 = vunpack.c.1.s8 %v547
    %v553 = vunpack.c.2.s8 %v547
    %v554 = vunpack.c.3.s8 %v547
    %v555 = vunpack.c.0.s8 %v548
    %v556 = vunpack.c.1.s8 %v548
    %v557 = vunpack.c.2.s8 %v548
    %v558 = vunpack.c.3.s8 %v548
    %v559 = vunpack.c.0.s8 %v549
    %v560 = vunpack.c.1.s8 %v549
    %v561 = vunpack.c.2.s8 %v549
    %v562 = vunpack.c.3.s8 %v549
    %v563 = vunpack.c.0.s8 %v550
    %v564 = vunpack.c.1.s8 %v550
    %v565 = vunpack.c.2.s8 %v550
    %v566 = vunpack.c.3.s8 %v550
    %v567 = vcvt.s32.f32 %v551
    %v568 = vcvt.s32.f32 %v552
    %v569 = vcvt.s32.f32 %v553
    %v570 = vcvt.s32.f32 %v554
    %v571 = vcvt.s32.f32 %v555
    %v572 = vcvt.s32.f32 %v556
    %v573 = vcvt.s32.f32 %v557
    %v574 = vcvt.s32.f32 %v558
    %v575 = vcvt.s32.f32 %v559
    %v576 = vcvt.s32.f32 %v560
    %v577 = vcvt.s32.f32 %v561
    %v578 = vcvt.s32.f32 %v562
    %v579 = vcvt.s32.f32 %v563
    %v580 = vcvt.s32.f32 %v564
    %v581 = vcvt.s32.f32 %v565
    %v582 = vcvt.s32.f32 %v566
    %v583 = vmax.f32 %v385, %v530
    %v584 = vmax.f32 %v386, %v531
    %v585 = vmax.f32 %v387, %v532
    %v586 = vmax.f32 %v388, %v533
    %v587 = vmax.f32 %v389, %v534
    %v588 = vmax.f32 %v390, %v535
    %v589 = vmax.f32 %v391, %v536
    %v590 = vmax.f32 %v392, %v537
    %v591 = vmax.f32 %v393, %v538
    %v592 = vmax.f32 %v394, %v539
    %v593 = vmax.f32 %v395, %v540
    %v594 = vmax.f32 %v396, %v541
    %v595 = vmax.f32 %v397, %v542
    %v596 = vmax.f32 %v398, %v543
    %v597 = vmax.f32 %v399, %v544
    %v598 = vmax.f32 %v400, %v545
    %v599 = vmul.f32 %v567, %v530
    %v600 = vmul.f32 %v568, %v531
    %v601 = vmul.f32 %v569, %v532
    %v602 = vmul.f32 %v570, %v533
    %v603 = vmul.f32 %v571, %v534
    %v604 = vmul.f32 %v572, %v535
    %v605 = vmul.f32 %v573, %v536
    %v606 = vmul.f32 %v574, %v537
    %v607 = vmul.f32 %v575, %v538
    %v608 = vmul.f32 %v576, %v539
    %v609 = vmul.f32 %v577, %v540
    %v610 = vmul.f32 %v578, %v541
    %v611 = vmul.f32 %v579, %v542
    %v612 = vmul.f32 %v580, %v543
    %v613 = vmul.f32 %v581, %v544
    %v614 = vmul.f32 %v582, %v545
    %v615 = vadd.f32 %v417, %v599
    %v616 = vadd.f32 %v418, %v600
    %v617 = vadd.f32 %v419, %v601
    %v618 = vadd.f32 %v420, %v602
    %v619 = vadd.f32 %v421, %v603
    %v620 = vadd.f32 %v422, %v604
    %v621 = vadd.f32 %v423, %v605
    %v622 = vadd.f32 %v424, %v606
    %v623 = vadd.f32 %v425, %v607
    %v624 = vadd.f32 %v426, %v608
    %v625 = vadd.f32 %v427, %v609
    %v626 = vadd.f32 %v428, %v610
    %v627 = vadd.f32 %v429, %v611
    %v628 = vadd.f32 %v430, %v612
    %v629 = vadd.f32 %v431, %v613
    %v630 = vadd.f32 %v432, %v614
    %v631 = vadd.f32 %v433, %v567
    %v632 = vadd.f32 %v434, %v568
    %v633 = vadd.f32 %v435, %v569
    %v634 = vadd.f32 %v436, %v570
    %v635 = vadd.f32 %v437, %v571
    %v636 = vadd.f32 %v438, %v572
    %v637 = vadd.f32 %v439, %v573
    %v638 = vadd.f32 %v440, %v574
    %v639 = vadd.f32 %v441, %v575
    %v640 = vadd.f32 %v442, %v576
    %v641 = vadd.f32 %v443, %v577
    %v642 = vadd.f32 %v444, %v578
    %v643 = vadd.f32 %v445, %v579
    %v644 = vadd.f32 %v446, %v580
    %v645 = vadd.f32 %v447, %v581
    %v646 = vadd.f32 %v448, %v582
    %v647 = vperm.slane %v37, 3
    %648 = vset.pattern.permute.xlu0 3
    %649 = vperm.xlu0 %648, %v21
    %v650 = vpop.permute.xlu0 %649
    %652 = vset.pattern.permute.xlu0 3
    %653 = vperm.xlu0 %652, %v22
    %v654 = vpop.permute.xlu0 %653
    %656 = vset.pattern.permute.xlu0 3
    %657 = vperm.xlu0 %656, %v23
    %v658 = vpop.permute.xlu0 %657
    %660 = vset.pattern.permute.xlu0 3
    %661 = vperm.xlu0 %660, %v24
    %v662 = vpop.permute.xlu0 %661
    %664 = vset.pattern.permute.xlu0 3
    %665 = vperm.xlu0 %664, %v25
    %v666 = vpop.permute.xlu0 %665
    %668 = vset.pattern.permute.xlu0 3
    %669 = vperm.xlu0 %668, %v26
    %v670 = vpop.permute.xlu0 %669
    %672 = vset.pattern.permute.xlu0 3
    %673 = vperm.xlu0 %672, %v27
    %v674 = vpop.permute.xlu0 %673
    %676 = vset.pattern.permute.xlu0 3
    %677 = vperm.xlu0 %676, %v28
    %v678 = vpop.permute.xlu0 %677
    %680 = vset.pattern.permute.xlu0 3
    %681 = vperm.xlu0 %680, %v29
    %v682 = vpop.permute.xlu0 %681
    %684 = vset.pattern.permute.xlu0 3
    %685 = vperm.xlu0 %684, %v30
    %v686 = vpop.permute.xlu0 %685
    %688 = vset.pattern.permute.xlu0 3
    %689 = vperm.xlu0 %688, %v31
    %v690 = vpop.permute.xlu0 %689
    %692 = vset.pattern.permute.xlu0 3
    %693 = vperm.xlu0 %692, %v32
    %v694 = vpop.permute.xlu0 %693
    %696 = vset.pattern.permute.xlu0 3
    %697 = vperm.xlu0 %696, %v33
    %v698 = vpop.permute.xlu0 %697
    %700 = vset.pattern.permute.xlu0 3
    %701 = vperm.xlu0 %700, %v34
    %v702 = vpop.permute.xlu0 %701
    %704 = vset.pattern.permute.xlu0 3
    %705 = vperm.xlu0 %704, %v35
    %v706 = vpop.permute.xlu0 %705
    %708 = vset.pattern.permute.xlu0 3
    %709 = vperm.xlu0 %708, %v36
    %v710 = vpop.permute.xlu0 %709
    %v712 = vsub.f32 %v647, %v650
    %v713 = vsub.f32 %v647, %v654
    %v714 = vsub.f32 %v647, %v658
    %v715 = vsub.f32 %v647, %v662
    %v716 = vsub.f32 %v647, %v666
    %v717 = vsub.f32 %v647, %v670
    %v718 = vsub.f32 %v647, %v674
    %v719 = vsub.f32 %v647, %v678
    %v720 = vsub.f32 %v647, %v682
    %v721 = vsub.f32 %v647, %v686
    %v722 = vsub.f32 %v647, %v690
    %v723 = vsub.f32 %v647, %v694
    %v724 = vsub.f32 %v647, %v698
    %v725 = vsub.f32 %v647, %v702
    %v726 = vsub.f32 %v647, %v706
    %v727 = vsub.f32 %v647, %v710
    %v728 = vand.u32 2147483647, %v712
    %v729 = vand.u32 2147483647, %v713
    %v730 = vand.u32 2147483647, %v714
    %v731 = vand.u32 2147483647, %v715
    %v732 = vand.u32 2147483647, %v716
    %v733 = vand.u32 2147483647, %v717
    %v734 = vand.u32 2147483647, %v718
    %v735 = vand.u32 2147483647, %v719
    %v736 = vand.u32 2147483647, %v720
    %v737 = vand.u32 2147483647, %v721
    %v738 = vand.u32 2147483647, %v722
    %v739 = vand.u32 2147483647, %v723
    %v740 = vand.u32 2147483647, %v724
    %v741 = vand.u32 2147483647, %v725
    %v742 = vand.u32 2147483647, %v726
    %v743 = vand.u32 2147483647, %v727
    %s744 = scalar_lea.vmem %s2, 96
    %v745 = vld [vmem:[%s744] sm:$0xff]
    %v746 = vld [vmem:[%s744 + $0x8] sm:$0xff]
    %v747 = vld [vmem:[%s744 + $0x10] sm:$0xff]
    %v748 = vld [vmem:[%s744 + $0x18] sm:$0xff]
    %v749 = vunpack.c.0.s8 %v745
    %v750 = vunpack.c.1.s8 %v745
    %v751 = vunpack.c.2.s8 %v745
    %v752 = vunpack.c.3.s8 %v745
    %v753 = vunpack.c.0.s8 %v746
    %v754 = vunpack.c.1.s8 %v746
    %v755 = vunpack.c.2.s8 %v746
    %v756 = vunpack.c.3.s8 %v746
    %v757 = vunpack.c.0.s8 %v747
    %v758 = vunpack.c.1.s8 %v747
    %v759 = vunpack.c.2.s8 %v747
    %v760 = vunpack.c.3.s8 %v747
    %v761 = vunpack.c.0.s8 %v748
    %v762 = vunpack.c.1.s8 %v748
    %v763 = vunpack.c.2.s8 %v748
    %v764 = vunpack.c.3.s8 %v748
    %v765 = vcvt.s32.f32 %v749
    %v766 = vcvt.s32.f32 %v750
    %v767 = vcvt.s32.f32 %v751
    %v768 = vcvt.s32.f32 %v752
    %v769 = vcvt.s32.f32 %v753
    %v770 = vcvt.s32.f32 %v754
    %v771 = vcvt.s32.f32 %v755
    %v772 = vcvt.s32.f32 %v756
    %v773 = vcvt.s32.f32 %v757
    %v774 = vcvt.s32.f32 %v758
    %v775 = vcvt.s32.f32 %v759
    %v776 = vcvt.s32.f32 %v760
    %v777 = vcvt.s32.f32 %v761
    %v778 = vcvt.s32.f32 %v762
    %v779 = vcvt.s32.f32 %v763
    %v780 = vcvt.s32.f32 %v764
    %v781 = vmax.f32 %v583, %v728
    %v782 = vmax.f32 %v584, %v729
    %v783 = vmax.f32 %v585, %v730
    %v784 = vmax.f32 %v586, %v731
    %v785 = vmax.f32 %v587, %v732
    %v786 = vmax.f32 %v588, %v733
    %v787 = vmax.f32 %v589, %v734
    %v788 = vmax.f32 %v590, %v735
    %v789 = vmax.f32 %v591, %v736
    %v790 = vmax.f32 %v592, %v737
    %v791 = vmax.f32 %v593, %v738
    %v792 = vmax.f32 %v594, %v739
    %v793 = vmax.f32 %v595, %v740
    %v794 = vmax.f32 %v596, %v741
    %v795 = vmax.f32 %v597, %v742
    %v796 = vmax.f32 %v598, %v743
    %v797 = vmul.f32 %v765, %v728
    %v798 = vmul.f32 %v766, %v729
    %v799 = vmul.f32 %v767, %v730
    %v800 = vmul.f32 %v768, %v731
    %v801 = vmul.f32 %v769, %v732
    %v802 = vmul.f32 %v770, %v733
    %v803 = vmul.f32 %v771, %v734
    %v804 = vmul.f32 %v772, %v735
    %v805 = vmul.f32 %v773, %v736
    %v806 = vmul.f32 %v774, %v737
    %v807 = vmul.f32 %v775, %v738
    %v808 = vmul.f32 %v776, %v739
    %v809 = vmul.f32 %v777, %v740
    %v810 = vmul.f32 %v778, %v741
    %v811 = vmul.f32 %v779, %v742
    %v812 = vmul.f32 %v780, %v743
    %v813 = vadd.f32 %v615, %v797
    %v814 = vadd.f32 %v616, %v798
    %v815 = vadd.f32 %v617, %v799
    %v816 = vadd.f32 %v618, %v800
    %v817 = vadd.f32 %v619, %v801
    %v818 = vadd.f32 %v620, %v802
    %v819 = vadd.f32 %v621, %v803
    %v820 = vadd.f32 %v622, %v804
    %v821 = vadd.f32 %v623, %v805
    %v822 = vadd.f32 %v624, %v806
    %v823 = vadd.f32 %v625, %v807
    %v824 = vadd.f32 %v626, %v808
    %v825 = vadd.f32 %v627, %v809
    %v826 = vadd.f32 %v628, %v810
    %v827 = vadd.f32 %v629, %v811
    %v828 = vadd.f32 %v630, %v812
    %v829 = vadd.f32 %v631, %v765
    %v830 = vadd.f32 %v632, %v766
    %v831 = vadd.f32 %v633, %v767
    %v832 = vadd.f32 %v634, %v768
    %v833 = vadd.f32 %v635, %v769
    %v834 = vadd.f32 %v636, %v770
    %v835 = vadd.f32 %v637, %v771
    %v836 = vadd.f32 %v638, %v772
    %v837 = vadd.f32 %v639, %v773
    %v838 = vadd.f32 %v640, %v774
    %v839 = vadd.f32 %v641, %v775
    %v840 = vadd.f32 %v642, %v776
    %v841 = vadd.f32 %v643, %v777
    %v842 = vadd.f32 %v644, %v778
    %v843 = vadd.f32 %v645, %v779
    %v844 = vadd.f32 %v646, %v780
    %vm845 = vcmp.le.f32.partialorder %v781, 0.7
    %vm846 = vcmp.le.f32.partialorder %v782, 0.7
    %vm847 = vcmp.le.f32.partialorder %v783, 0.7
    %vm848 = vcmp.le.f32.partialorder %v784, 0.7
    %vm849 = vcmp.le.f32.partialorder %v785, 0.7
    %vm850 = vcmp.le.f32.partialorder %v786, 0.7
    %vm851 = vcmp.le.f32.partialorder %v787, 0.7
    %vm852 = vcmp.le.f32.partialorder %v788, 0.7
    %vm853 = vcmp.le.f32.partialorder %v789, 0.7
    %vm854 = vcmp.le.f32.partialorder %v790, 0.7
    %vm855 = vcmp.le.f32.partialorder %v791, 0.7
    %vm856 = vcmp.le.f32.partialorder %v792, 0.7
    %vm857 = vcmp.le.f32.partialorder %v793, 0.7
    %vm858 = vcmp.le.f32.partialorder %v794, 0.7
    %vm859 = vcmp.le.f32.partialorder %v795, 0.7
    %vm860 = vcmp.le.f32.partialorder %v796, 0.7
    %v861 = vmul.f32 %v829, 0.7
    %v862 = vmul.f32 %v830, 0.7
    %v863 = vmul.f32 %v831, 0.7
    %v864 = vmul.f32 %v832, 0.7
    %v865 = vmul.f32 %v833, 0.7
    %v866 = vmul.f32 %v834, 0.7
    %v867 = vmul.f32 %v835, 0.7
    %v868 = vmul.f32 %v836, 0.7
    %v869 = vmul.f32 %v837, 0.7
    %v870 = vmul.f32 %v838, 0.7
    %v871 = vmul.f32 %v839, 0.7
    %v872 = vmul.f32 %v840, 0.7
    %v873 = vmul.f32 %v841, 0.7
    %v874 = vmul.f32 %v842, 0.7
    %v875 = vmul.f32 %v843, 0.7
    %v876 = vmul.f32 %v844, 0.7
    %v877 = vsub.f32 %v861, %v813
    %v878 = vsub.f32 %v862, %v814
    %v879 = vsub.f32 %v863, %v815
    %v880 = vsub.f32 %v864, %v816
    %v881 = vsub.f32 %v865, %v817
    %v882 = vsub.f32 %v866, %v818
    %v883 = vsub.f32 %v867, %v819
    %v884 = vsub.f32 %v868, %v820
    %v885 = vsub.f32 %v869, %v821
    %v886 = vsub.f32 %v870, %v822
    %v887 = vsub.f32 %v871, %v823
    %v888 = vsub.f32 %v872, %v824
    %v889 = vsub.f32 %v873, %v825
    %v890 = vsub.f32 %v874, %v826
    %v891 = vsub.f32 %v875, %v827
    %v892 = vsub.f32 %v876, %v828
    %v893 = vsel %vm845, %v877, 0.0
    %v894 = vsel %vm846, %v878, 0.0
    %v895 = vsel %vm847, %v879, 0.0
    %v896 = vsel %vm848, %v880, 0.0
    %v897 = vsel %vm849, %v881, 0.0
    %v898 = vsel %vm850, %v882, 0.0
    %v899 = vsel %vm851, %v883, 0.0
    %v900 = vsel %vm852, %v884, 0.0
    %v901 = vsel %vm853, %v885, 0.0
    %v902 = vsel %vm854, %v886, 0.0
    %v903 = vsel %vm855, %v887, 0.0
    %v904 = vsel %vm856, %v888, 0.0
    %v905 = vsel %vm857, %v889, 0.0
    %v906 = vsel %vm858, %v890, 0.0
    %v907 = vsel %vm859, %v891, 0.0
    %v908 = vsel %vm860, %v892, 0.0
    %v909 = vsel %vm845, %v829, 0.0
    %v910 = vsel %vm846, %v830, 0.0
    %v911 = vsel %vm847, %v831, 0.0
    %v912 = vsel %vm848, %v832, 0.0
    %v913 = vsel %vm849, %v833, 0.0
    %v914 = vsel %vm850, %v834, 0.0
    %v915 = vsel %vm851, %v835, 0.0
    %v916 = vsel %vm852, %v836, 0.0
    %v917 = vsel %vm853, %v837, 0.0
    %v918 = vsel %vm854, %v838, 0.0
    %v919 = vsel %vm855, %v839, 0.0
    %v920 = vsel %vm856, %v840, 0.0
    %v921 = vsel %vm857, %v841, 0.0
    %v922 = vsel %vm858, %v842, 0.0
    %v923 = vsel %vm859, %v843, 0.0
    %v924 = vsel %vm860, %v844, 0.0
    %v925 = vld [vmem:[#allocation2] sm:$0xff]
    %v926 = vadd.f32 %v893, %v894
    %v927 = vadd.f32 %v926, %v895
    %v928 = vadd.f32 %v927, %v896
    %v929 = vadd.f32 %v928, %v897
    %v930 = vadd.f32 %v929, %v898
    %v931 = vadd.f32 %v930, %v899
    %v932 = vadd.f32 %v931, %v900
    %v933 = vadd.f32 %v932, %v901
    %v934 = vadd.f32 %v933, %v902
    %v935 = vadd.f32 %v934, %v903
    %v936 = vadd.f32 %v935, %v904
    %v937 = vadd.f32 %v936, %v905
    %v938 = vadd.f32 %v937, %v906
    %v939 = vadd.f32 %v938, %v907
    %v940 = vadd.f32 %v939, %v908
    %v941 = vadd.f32 %v925, %v940
    %942 = vst [vmem:[#allocation2] sm:$0xff] %v941
    %s943 = scalar_lea.vmem [#allocation2], 8
    %v944 = vld [vmem:[%s943] sm:$0xff]
    %v945 = vadd.f32 %v909, %v910
    %v946 = vadd.f32 %v945, %v911
    %v947 = vadd.f32 %v946, %v912
    %v948 = vadd.f32 %v947, %v913
    %v949 = vadd.f32 %v948, %v914
    %v950 = vadd.f32 %v949, %v915
    %v951 = vadd.f32 %v950, %v916
    %v952 = vadd.f32 %v951, %v917
    %v953 = vadd.f32 %v952, %v918
    %v954 = vadd.f32 %v953, %v919
    %v955 = vadd.f32 %v954, %v920
    %v956 = vadd.f32 %v955, %v921
    %v957 = vadd.f32 %v956, %v922
    %v958 = vadd.f32 %v957, %v923
    %v959 = vadd.f32 %v958, %v924
    %v960 = vadd.f32 %v944, %v959
    %961 = vst [vmem:[%s943] sm:$0xff] %v960
    // Predicated region
    $region18: #{tpu_custom_call.1} parent=1 // pred_check
      _
    $region19: #{tpu_custom_call.1} parent=1 // pred_check_branch
      %963 = sbr.rel (0) target = $region21
    $region20: #{tpu_custom_call.1} parent=1 // pred_region
      %965 = vsyncadd [#allocation3], 0
      %s966 = sshll.u32 [#allocation2], 4
      %s967 = int_to_ptr.vmem [resolvable:$true] %s966
      %s968 = sshll.u32 %s3, 4
      %s969 = int_to_ptr.hbm [resolvable:$true] %s968
      %974 = dma.vmem_to_hbm [thread:$0]  %s967, 256, %s969, [#allocation3], 128, 128, 8
    $region21: #{tpu_custom_call.1} parent=1 // pred_fallthru
      _
    // Predicated region
    $region22: #{tpu_custom_call.1} parent=1 // pred_check
      _
    $region23: #{tpu_custom_call.1} parent=1 // pred_check_branch
      %976 = sbr.rel (0) target = $region25
    $region24: #{tpu_custom_call.1} parent=1 // pred_region
      %978 = dma.done [#allocation3], 256
    $region25: #{tpu_custom_call.1} parent=1 // pred_fallthru
      _
    %979 = vsyncpa [#allocation3], 1

</llo_original>
